<compile_context>
chip_gen: v5e
topology: v5e:2x2
jax: 0.10.0
libtpu: 0.0.40
codegen_flags: <defaults>
</compile_context>

<pallas_src>
import functools

import jax
import jax.numpy as jnp
from jax.experimental import pallas as pl
from jax.experimental.pallas import tpu as pltpu

EPS = 1e-5     # nn.LayerNorm default
LANE = 128     # TPU lane width


def _round_up(n, m):
    return (n + m - 1) // m * m


def _tpu_vmem_bytes():
    try:
        return int(pltpu.get_tpu_info().vmem_capacity_bytes)
    except Exception:
        return 64 * 1024 * 1024   # conservative default (v7x per-TC VMEM)


def _prenorm_linear_kernel(x_ref, mask_ref, gamma_ref, beta_ref, w_ref, b_ref,
                           o_ref, *, true_d, need_mask):
    # x_ref: (tm, d_pad) pipelined row tile.
    # mask/gamma/beta/b: (1, d_pad) f32 resident; w: (d_pad, d_pad) bf16 resident.
    x = x_ref[...].astype(jnp.float32)
    inv_d = jnp.float32(1.0 / true_d)

    # LayerNorm over the true feature width. Pad lanes of x are zero, so the
    # row sum already equals the sum over real lanes; the resident 0/1 mask
    # kills the (0 - mean) contribution of pad lanes in the variance.
    mean = jnp.sum(x, axis=-1, keepdims=True) * inv_d
    centered = x - mean
    if need_mask:
        centered = centered * mask_ref[...]
    var = jnp.sum(centered * centered, axis=-1, keepdims=True) * inv_d
    x_hat = centered * jax.lax.rsqrt(var + EPS)
    # gamma/beta are zero-padded -> y is exactly 0 on pad lanes, so the padded
    # weight rows contribute nothing to the matmul.
    y = x_hat * gamma_ref[...] + beta_ref[...]

    # fn == Linear(D, D): bf16 operands, f32 accumulation on the MXU.
    out = jnp.dot(y.astype(jnp.bfloat16), w_ref[...],
                  preferred_element_type=jnp.float32) + b_ref[...]
    o_ref[...] = out.astype(o_ref.dtype)


def prepare_prenorm_linear_params(gamma, beta, w, b):
    """Pad to a lane-dense (multiple-of-128) feature axis and cast W to bf16.

    Done once at module init so no per-forward param copies sit on the
    critical path.
    """
    D = w.shape[0]
    d_pad = max(LANE, _round_up(D, LANE))
    pad = d_pad - D
    gamma_p = jnp.pad(gamma.reshape(1, D).astype(jnp.float32), ((0, 0), (0, pad)))
    beta_p = jnp.pad(beta.reshape(1, D).astype(jnp.float32), ((0, 0), (0, pad)))
    b_p = jnp.pad(b.reshape(1, D).astype(jnp.float32), ((0, 0), (0, pad)))
    w_p = jnp.pad(w.astype(jnp.bfloat16), ((0, pad), (0, pad)))
    mask_p = jnp.pad(jnp.ones((1, D), jnp.float32), ((0, 0), (0, pad)))
    return gamma_p, beta_p, w_p, b_p, mask_p


def prenorm_linear(x, gamma_p, beta_p, w_p, b_p, mask_p):
    """x: (B, S, D) -> (B, S, D).  LayerNorm(D) then Linear(D, D)."""
    B, S, D = x.shape
    rows = B * S
    d_pad = w_p.shape[0]
    need_mask = (d_pad != D)

    x2 = x.reshape(rows, D)
    if need_mask:
        # Only for non-128-multiple D (e.g. the small demo): pad the feature
        # axis with zeros so the lane axis is dense.  When D % 128 == 0 the
        # activation is passed through untouched (no extra HBM copies).
        x2 = jnp.pad(x2, ((0, 0), (0, d_pad - D)))

    # ---- generation-aware tiling -------------------------------------------
    vmem = _tpu_vmem_bytes()
    # ~75% of physical VMEM: 48 MiB on v7x (64 MiB), 96 MiB on v5e/v6e (128 MiB).
    vmem_limit = min(vmem * 3 // 4, 96 * 1024 * 1024)
    tm_cap = 512 if vmem <= 64 * 1024 * 1024 else 1024

    x_bytes = x.dtype.itemsize
    # Per-row VMEM: double-buffered in + out tiles plus ~4 live f32 temporaries.
    per_row = d_pad * (2 * x_bytes + 2 * x_bytes + 4 * 4)
    # Budget the weight as double-buffered so the fallback path also fits.
    resident = 2 * int(w_p.size) * w_p.dtype.itemsize + 8 * d_pad * 4
    headroom = vmem_limit - resident - (4 << 20)
    tm_fit = max(8, (headroom // max(per_row, 1)) // 8 * 8) if headroom > 0 else 8
    tm = min(tm_cap, tm_fit, _round_up(rows, 8))
    if rows > 8:
        # >= 2 grid steps so the "parallel" row axis can shard across v7x's
        # two TensorCores (neutral on v5e/v6e).
        tm = min(tm, _round_up(pl.cdiv(rows, 2), 8))
    tm = max(tm, 8)
    grid = (pl.cdiv(rows, tm),)
    # NOTE: for very large D (d_pad >= ~2048 on v7x, ~4096 on v5e/v6e) the
    # resident (D, D) weight should get an extra N (output-column) grid axis;
    # not needed at the sizes exercised here.

    kernel = functools.partial(_prenorm_linear_kernel,
                               true_d=D, need_mask=need_mask)

    def run(single_buffer_resident):
        if single_buffer_resident:
            def resident_spec(shape):
                return pl.BlockSpec(shape, lambda i: (0, 0),
                                    pipeline_mode=pl.Buffered(1))
        else:
            def resident_spec(shape):
                return pl.BlockSpec(shape, lambda i: (0, 0))

        in_specs = [
            pl.BlockSpec((tm, d_pad), lambda i: (i, 0)),   # x: pipelined row tiles
            resident_spec((1, d_pad)),                     # mask
            resident_spec((1, d_pad)),                     # gamma
            resident_spec((1, d_pad)),                     # beta
            resident_spec((d_pad, d_pad)),                 # W (bf16)
            resident_spec((1, d_pad)),                     # bias
        ]
        return pl.pallas_call(
            kernel,
            out_shape=jax.ShapeDtypeStruct((rows, d_pad), x.dtype),
            grid_spec=pltpu.PrefetchScalarGridSpec(
                num_scalar_prefetch=0,
                grid=grid,
                in_specs=in_specs,
                out_specs=pl.BlockSpec((tm, d_pad), lambda i: (i, 0)),
            ),
            compiler_params=pltpu.CompilerParams(
                dimension_semantics=("parallel",),
                vmem_limit_bytes=int(vmem_limit),
            ),
            cost_estimate=pl.CostEstimate(
                flops=int(2 * rows * d_pad * d_pad),
                transcendentals=int(rows),
                bytes_accessed=int(rows * d_pad * 2 * x_bytes + 2 * d_pad * d_pad),
            ),
        )(x2, mask_p, gamma_p, beta_p, w_p, b_p)

    try:
        out2d = run(single_buffer_resident=True)
    except Exception:
        # pl.Buffered(1) on resident operands unsupported by this jax/libtpu:
        # fall back to default (double-buffered) resident specs.
        out2d = run(single_buffer_resident=False)

    if need_mask:
        out2d = out2d[:, :D]
    return out2d.reshape(B, S, D)


class PreNormPallas:
    """JAX/Pallas analogue of PreNorm(dim, fn=Linear(dim, dim))."""

    def __init__(self, dim, key):
        k_w, k_b = jax.random.split(key)
        self.dim = dim
        # LayerNorm params (torch default init: gamma=1, beta=0)
        self.gamma = jnp.ones((dim,), jnp.float32)
        self.beta = jnp.zeros((dim,), jnp.float32)
        # fn = Linear(dim, dim), deterministic init
        bound = 1.0 / (dim ** 0.5)
        self.w = jax.random.uniform(k_w, (dim, dim), jnp.float32, -bound, bound)
        self.b = jax.random.uniform(k_b, (dim,), jnp.float32, -bound, bound)
        # Pre-pad / pre-cast once (lane-dense feature axis, bf16 weight).
        (self.gamma_p, self.beta_p, self.w_p, self.b_p, self.mask_p) = (
            prepare_prenorm_linear_params(self.gamma, self.beta, self.w, self.b))

    def __call__(self, x, cond_vec=None):
        # cond_vec is accepted but unused, matching the PyTorch forward.
        return prenorm_linear(x, self.gamma_p, self.beta_p, self.w_p, self.b_p,
                              self.mask_p)


def _reference(x, gamma, beta, w, b):
    mean = jnp.mean(x, axis=-1, keepdims=True)
    var = jnp.mean((x - mean) ** 2, axis=-1, keepdims=True)
    y = (x - mean) / jnp.sqrt(var + EPS) * gamma + beta
    return y @ w + b


if __name__ == "__main__":
    key = jax.random.PRNGKey(0)
    k_x, k_c, k_p, k_x2 = jax.random.split(key, 4)

    # Case 1: small, non-128-multiple feature dim (masked / feature-padded path).
    batch, seq, dim = 2, 8, 32
    x = jax.random.normal(k_x, (batch, seq, dim), jnp.float32)
    cond_vec = jax.random.normal(k_c, (batch, dim), jnp.float32)  # unused, as in PyTorch
    module = PreNormPallas(dim, k_p)
    out = jax.block_until_ready(module(x, cond_vec))
    ref = _reference(x, module.gamma, module.beta, module.w, module.b)
    assert out.shape == (batch, seq, dim)
    # bf16 MXU operands (f32 accumulation) -> ~0.4% relative error vs pure f32.
    assert jnp.allclose(out, ref, atol=2e-2, rtol=2e-2), float(jnp.max(jnp.abs(out - ref)))

    # Case 2: lane-dense feature dim with a ragged row count (no-pad / cdiv-grid
    # path with a partial last row tile).
    b2, s2, d2 = 2, 9, 128
    x_b = jax.random.normal(k_x2, (b2, s2, d2), jnp.float32)
    module2 = PreNormPallas(d2, k_p)
    out_b = jax.block_until_ready(module2(x_b))
    ref_b = _reference(x_b, module2.gamma, module2.beta, module2.w, module2.b)
    assert out_b.shape == (b2, s2, d2)
    assert jnp.allclose(out_b, ref_b, atol=2e-2, rtol=2e-2), float(jnp.max(jnp.abs(out_b - ref_b)))

    print("KERNEL_OK")
</pallas_src>

<mosaic_0001>
module attributes {stable_mosaic.version = 11 : i64} {
  func.func @_prenorm_linear_kernel(%arg0: i32, %arg1: memref<8x128xf32, #tpu.memory_space<vmem>>, %arg2: memref<1x128xf32, #tpu.memory_space<vmem>>, %arg3: memref<1x128xf32, #tpu.memory_space<vmem>>, %arg4: memref<1x128xf32, #tpu.memory_space<vmem>>, %arg5: memref<128x128xbf16, #tpu.memory_space<vmem>>, %arg6: memref<1x128xf32, #tpu.memory_space<vmem>>, %arg7: memref<8x128xf32, #tpu.memory_space<vmem>>) attributes {dimension_semantics = [#tpu.dimension_semantics<parallel>], iteration_bounds = array<i64: 2>, scalar_prefetch = 0 : i64, scratch_operands = 0 : i64, tpu.core_type = #tpu.core_type<tc>, window_params = [{transform_indices = @transform_0, window_bounds = array<i64: 8, 128>}, {pipeline_mode = #tpu.pipeline_mode<synchronous>, transform_indices = @transform_1, window_bounds = array<i64: 1, 128>}, {pipeline_mode = #tpu.pipeline_mode<synchronous>, transform_indices = @transform_2, window_bounds = array<i64: 1, 128>}, {pipeline_mode = #tpu.pipeline_mode<synchronous>, transform_indices = @transform_3, window_bounds = array<i64: 1, 128>}, {pipeline_mode = #tpu.pipeline_mode<synchronous>, transform_indices = @transform_4, window_bounds = array<i64: 128, 128>}, {pipeline_mode = #tpu.pipeline_mode<synchronous>, transform_indices = @transform_5, window_bounds = array<i64: 1, 128>}, {transform_indices = @transform_6, window_bounds = array<i64: 8, 128>}]} {
    %c0 = arith.constant 0 : index
    %c0_0 = arith.constant 0 : index
    %0 = vector.load %arg1[%c0, %c0_0] : memref<8x128xf32, #tpu.memory_space<vmem>>, vector<8x128xf32>
    %cst = arith.constant dense<0.000000e+00> : vector<8xf32>
    %1 = vector.multi_reduction <add>, %0, %cst [1] : vector<8x128xf32> to vector<8xf32>
    %2 = vector.shape_cast %1 : vector<8xf32> to vector<8x1xf32>
    %cst_1 = arith.constant 3.125000e-02 : f32
    %3 = vector.broadcast %cst_1 : f32 to vector<8x1xf32>
    %4 = arith.mulf %2, %3 : vector<8x1xf32>
    %5 = vector.broadcast %4 : vector<8x1xf32> to vector<8x128xf32>
    %6 = arith.subf %0, %5 : vector<8x128xf32>
    %c0_2 = arith.constant 0 : index
    %c0_3 = arith.constant 0 : index
    %7 = vector.load %arg2[%c0_2, %c0_3] : memref<1x128xf32, #tpu.memory_space<vmem>>, vector<1x128xf32>
    %8 = vector.broadcast %7 : vector<1x128xf32> to vector<8x128xf32>
    %9 = arith.mulf %6, %8 : vector<8x128xf32>
    %10 = arith.mulf %9, %9 : vector<8x128xf32>
    %cst_4 = arith.constant dense<0.000000e+00> : vector<8xf32>
    %11 = vector.multi_reduction <add>, %10, %cst_4 [1] : vector<8x128xf32> to vector<8xf32>
    %12 = vector.shape_cast %11 : vector<8xf32> to vector<8x1xf32>
    %cst_5 = arith.constant 3.125000e-02 : f32
    %13 = vector.broadcast %cst_5 : f32 to vector<8x1xf32>
    %14 = arith.mulf %12, %13 : vector<8x1xf32>
    %cst_6 = arith.constant 9.99999974E-6 : f32
    %15 = vector.broadcast %cst_6 : f32 to vector<8x1xf32>
    %16 = arith.addf %14, %15 : vector<8x1xf32>
    %17 = math.rsqrt %16 : vector<8x1xf32>
    %18 = vector.broadcast %17 : vector<8x1xf32> to vector<8x128xf32>
    %19 = arith.mulf %9, %18 : vector<8x128xf32>
    %c0_7 = arith.constant 0 : index
    %c0_8 = arith.constant 0 : index
    %20 = vector.load %arg3[%c0_7, %c0_8] : memref<1x128xf32, #tpu.memory_space<vmem>>, vector<1x128xf32>
    %21 = vector.broadcast %20 : vector<1x128xf32> to vector<8x128xf32>
    %22 = arith.mulf %19, %21 : vector<8x128xf32>
    %c0_9 = arith.constant 0 : index
    %c0_10 = arith.constant 0 : index
    %23 = vector.load %arg4[%c0_9, %c0_10] : memref<1x128xf32, #tpu.memory_space<vmem>>, vector<1x128xf32>
    %24 = vector.broadcast %23 : vector<1x128xf32> to vector<8x128xf32>
    %25 = arith.addf %22, %24 : vector<8x128xf32>
    %26 = arith.truncf %25 : vector<8x128xf32> to vector<8x128xbf16>
    %c0_11 = arith.constant 0 : index
    %c0_12 = arith.constant 0 : index
    %27 = vector.load %arg5[%c0_11, %c0_12] : memref<128x128xbf16, #tpu.memory_space<vmem>>, vector<128x128xbf16>
    %cst_13 = arith.constant dense<0.000000e+00> : vector<8x128xf32>
    %28 = tpu.matmul %26, %27, %cst_13 {dimension_numbers = #tpu.dot_dimension_numbers<[1], [0], [0], [1], [0, 0, 1, 1], [], []>} : vector<8x128xbf16>, vector<128x128xbf16>, vector<8x128xf32> -> vector<8x128xf32>
    %c0_14 = arith.constant 0 : index
    %c0_15 = arith.constant 0 : index
    %29 = vector.load %arg6[%c0_14, %c0_15] : memref<1x128xf32, #tpu.memory_space<vmem>>, vector<1x128xf32>
    %30 = vector.broadcast %29 : vector<1x128xf32> to vector<8x128xf32>
    %31 = arith.addf %28, %30 : vector<8x128xf32>
    %c0_16 = arith.constant 0 : index
    %c0_17 = arith.constant 0 : index
    %32 = vector.load %arg7[%c0_16, %c0_17] : memref<8x128xf32, #tpu.memory_space<vmem>>, vector<8x128xf32>
    tpu.vector_store %arg7[%c0_16, %c0_17], %31 {strides = array<i32>} : memref<8x128xf32, #tpu.memory_space<vmem>>, vector<8x128xf32>,
    return
  }
  func.func @transform_0(%arg0: i32) -> (i32, i32) {
    %c0_i32 = arith.constant 0 : i32
    %c0_i32_0 = arith.constant 0 : i32
    return %arg0, %c0_i32 : i32, i32
  }
  func.func @transform_1(%arg0: i32) -> (i32, i32) {
    %c0_i32 = arith.constant 0 : i32
    %c0_i32_0 = arith.constant 0 : i32
    %c0_i32_1 = arith.constant 0 : i32
    return %c0_i32, %c0_i32_0 : i32, i32
  }
  func.func @transform_2(%arg0: i32) -> (i32, i32) {
    %c0_i32 = arith.constant 0 : i32
    %c0_i32_0 = arith.constant 0 : i32
    %c0_i32_1 = arith.constant 0 : i32
    return %c0_i32, %c0_i32_0 : i32, i32
  }
  func.func @transform_3(%arg0: i32) -> (i32, i32) {
    %c0_i32 = arith.constant 0 : i32
    %c0_i32_0 = arith.constant 0 : i32
    %c0_i32_1 = arith.constant 0 : i32
    return %c0_i32, %c0_i32_0 : i32, i32
  }
  func.func @transform_4(%arg0: i32) -> (i32, i32) {
    %c0_i32 = arith.constant 0 : i32
    %c0_i32_0 = arith.constant 0 : i32
    %c0_i32_1 = arith.constant 0 : i32
    return %c0_i32, %c0_i32_0 : i32, i32
  }
  func.func @transform_5(%arg0: i32) -> (i32, i32) {
    %c0_i32 = arith.constant 0 : i32
    %c0_i32_0 = arith.constant 0 : i32
    %c0_i32_1 = arith.constant 0 : i32
    return %c0_i32, %c0_i32_0 : i32, i32
  }
  func.func @transform_6(%arg0: i32) -> (i32, i32) {
    %c0_i32 = arith.constant 0 : i32
    %c0_i32_0 = arith.constant 0 : i32
    return %arg0, %c0_i32 : i32, i32
  }
}

module attributes {stable_mosaic.version = 11 : i64} {
  func.func @_prenorm_linear_kernel(%arg0: i32, %arg1: memref<8x128xf32, #tpu.memory_space<vmem>>, %arg2: memref<1x128xf32, #tpu.memory_space<vmem>>, %arg3: memref<1x128xf32, #tpu.memory_space<vmem>>, %arg4: memref<1x128xf32, #tpu.memory_space<vmem>>, %arg5: memref<128x128xbf16, #tpu.memory_space<vmem>>, %arg6: memref<1x128xf32, #tpu.memory_space<vmem>>, %arg7: memref<8x128xf32, #tpu.memory_space<vmem>>) attributes {dimension_semantics = [#tpu.dimension_semantics<parallel>], iteration_bounds = array<i64: 2>, scalar_prefetch = 0 : i64, scratch_operands = 0 : i64, tpu.core_type = #tpu.core_type<tc>, window_params = [{transform_indices = @transform_0, window_bounds = array<i64: 8, 128>}, {pipeline_mode = #tpu.pipeline_mode<synchronous>, transform_indices = @transform_1, window_bounds = array<i64: 1, 128>}, {pipeline_mode = #tpu.pipeline_mode<synchronous>, transform_indices = @transform_2, window_bounds = array<i64: 1, 128>}, {pipeline_mode = #tpu.pipeline_mode<synchronous>, transform_indices = @transform_3, window_bounds = array<i64: 1, 128>}, {pipeline_mode = #tpu.pipeline_mode<synchronous>, transform_indices = @transform_4, window_bounds = array<i64: 128, 128>}, {pipeline_mode = #tpu.pipeline_mode<synchronous>, transform_indices = @transform_5, window_bounds = array<i64: 1, 128>}, {transform_indices = @transform_6, window_bounds = array<i64: 8, 128>}]} {
    %c0 = arith.constant 0 : index
    %c0_0 = arith.constant 0 : index
    %0 = vector.load %arg1[%c0, %c0_0] : memref<8x128xf32, #tpu.memory_space<vmem>>, vector<8x128xf32>
    %cst = arith.constant dense<0.000000e+00> : vector<8xf32>
    %1 = vector.multi_reduction <add>, %0, %cst [1] : vector<8x128xf32> to vector<8xf32>
    %2 = vector.shape_cast %1 : vector<8xf32> to vector<8x1xf32>
    %cst_1 = arith.constant 3.125000e-02 : f32
    %3 = vector.broadcast %cst_1 : f32 to vector<8x1xf32>
    %4 = arith.mulf %2, %3 : vector<8x1xf32>
    %5 = vector.broadcast %4 : vector<8x1xf32> to vector<8x128xf32>
    %6 = arith.subf %0, %5 : vector<8x128xf32>
    %c0_2 = arith.constant 0 : index
    %c0_3 = arith.constant 0 : index
    %7 = vector.load %arg2[%c0_2, %c0_3] : memref<1x128xf32, #tpu.memory_space<vmem>>, vector<1x128xf32>
    %8 = vector.broadcast %7 : vector<1x128xf32> to vector<8x128xf32>
    %9 = arith.mulf %6, %8 : vector<8x128xf32>
    %10 = arith.mulf %9, %9 : vector<8x128xf32>
    %cst_4 = arith.constant dense<0.000000e+00> : vector<8xf32>
    %11 = vector.multi_reduction <add>, %10, %cst_4 [1] : vector<8x128xf32> to vector<8xf32>
    %12 = vector.shape_cast %11 : vector<8xf32> to vector<8x1xf32>
    %cst_5 = arith.constant 3.125000e-02 : f32
    %13 = vector.broadcast %cst_5 : f32 to vector<8x1xf32>
    %14 = arith.mulf %12, %13 : vector<8x1xf32>
    %cst_6 = arith.constant 9.99999974E-6 : f32
    %15 = vector.broadcast %cst_6 : f32 to vector<8x1xf32>
    %16 = arith.addf %14, %15 : vector<8x1xf32>
    %17 = math.rsqrt %16 : vector<8x1xf32>
    %18 = vector.broadcast %17 : vector<8x1xf32> to vector<8x128xf32>
    %19 = arith.mulf %9, %18 : vector<8x128xf32>
    %c0_7 = arith.constant 0 : index
    %c0_8 = arith.constant 0 : index
    %20 = vector.load %arg3[%c0_7, %c0_8] : memref<1x128xf32, #tpu.memory_space<vmem>>, vector<1x128xf32>
    %21 = vector.broadcast %20 : vector<1x128xf32> to vector<8x128xf32>
    %22 = arith.mulf %19, %21 : vector<8x128xf32>
    %c0_9 = arith.constant 0 : index
    %c0_10 = arith.constant 0 : index
    %23 = vector.load %arg4[%c0_9, %c0_10] : memref<1x128xf32, #tpu.memory_space<vmem>>, vector<1x128xf32>
    %24 = vector.broadcast %23 : vector<1x128xf32> to vector<8x128xf32>
    %25 = arith.addf %22, %24 : vector<8x128xf32>
    %26 = arith.truncf %25 : vector<8x128xf32> to vector<8x128xbf16>
    %c0_11 = arith.constant 0 : index
    %c0_12 = arith.constant 0 : index
    %27 = vector.load %arg5[%c0_11, %c0_12] : memref<128x128xbf16, #tpu.memory_space<vmem>>, vector<128x128xbf16>
    %cst_13 = arith.constant dense<0.000000e+00> : vector<8x128xf32>
    %28 = tpu.matmul %26, %27, %cst_13 {dimension_numbers = #tpu.dot_dimension_numbers<[1], [0], [0], [1], [0, 0, 1, 1], [], []>} : vector<8x128xbf16>, vector<128x128xbf16>, vector<8x128xf32> -> vector<8x128xf32>
    %c0_14 = arith.constant 0 : index
    %c0_15 = arith.constant 0 : index
    %29 = vector.load %arg6[%c0_14, %c0_15] : memref<1x128xf32, #tpu.memory_space<vmem>>, vector<1x128xf32>
    %30 = vector.broadcast %29 : vector<1x128xf32> to vector<8x128xf32>
    %31 = arith.addf %28, %30 : vector<8x128xf32>
    %c0_16 = arith.constant 0 : index
    %c0_17 = arith.constant 0 : index
    %32 = vector.load %arg7[%c0_16, %c0_17] : memref<8x128xf32, #tpu.memory_space<vmem>>, vector<8x128xf32>
    tpu.vector_store %arg7[%c0_16, %c0_17], %31 {strides = array<i32>} : memref<8x128xf32, #tpu.memory_space<vmem>>, vector<8x128xf32>,
    return
  }
  func.func @transform_0(%arg0: i32) -> (i32, i32) {
    %c0_i32 = arith.constant 0 : i32
    %c0_i32_0 = arith.constant 0 : i32
    return %arg0, %c0_i32 : i32, i32
  }
  func.func @transform_1(%arg0: i32) -> (i32, i32) {
    %c0_i32 = arith.constant 0 : i32
    %c0_i32_0 = arith.constant 0 : i32
    %c0_i32_1 = arith.constant 0 : i32
    return %c0_i32, %c0_i32_0 : i32, i32
  }
  func.func @transform_2(%arg0: i32) -> (i32, i32) {
    %c0_i32 = arith.constant 0 : i32
    %c0_i32_0 = arith.constant 0 : i32
    %c0_i32_1 = arith.constant 0 : i32
    return %c0_i32, %c0_i32_0 : i32, i32
  }
  func.func @transform_3(%arg0: i32) -> (i32, i32) {
    %c0_i32 = arith.constant 0 : i32
    %c0_i32_0 = arith.constant 0 : i32
    %c0_i32_1 = arith.constant 0 : i32
    return %c0_i32, %c0_i32_0 : i32, i32
  }
  func.func @transform_4(%arg0: i32) -> (i32, i32) {
    %c0_i32 = arith.constant 0 : i32
    %c0_i32_0 = arith.constant 0 : i32
    %c0_i32_1 = arith.constant 0 : i32
    return %c0_i32, %c0_i32_0 : i32, i32
  }
  func.func @transform_5(%arg0: i32) -> (i32, i32) {
    %c0_i32 = arith.constant 0 : i32
    %c0_i32_0 = arith.constant 0 : i32
    %c0_i32_1 = arith.constant 0 : i32
    return %c0_i32, %c0_i32_0 : i32, i32
  }
  func.func @transform_6(%arg0: i32) -> (i32, i32) {
    %c0_i32 = arith.constant 0 : i32
    %c0_i32_0 = arith.constant 0 : i32
    return %arg0, %c0_i32 : i32, i32
  }
}

</mosaic_0001>

<llo_original>
// kernel: tpu_custom_call.1
$region0: #{tpu_custom_call.1}
  #allocation0 [shape = 'u32[]', space=smem, size = 0x4, offset = 0x4, fixed_abs, tag = 'smem constant byte address 0x4 - core index']
  #allocation1 [shape = 'u32[72,128]{1,0:T(1,128)}', space=vmem, size = 0x9000, scoped, tag = 'internal scratch']
  %s0 = inlined_call_operand.hbm [shape: f32[16,128], index: 0, kind: input, shape index: {}]
  %s1 = inlined_call_operand.hbm [shape: f32[1,128], index: 1, kind: input, shape index: {}]
  %s2 = inlined_call_operand.vmem [shape: f32[1,128], index: 2, kind: input, shape index: {}]
  %s3 = inlined_call_operand.vmem [shape: f32[1,128], index: 3, kind: input, shape index: {}]
  %s4 = inlined_call_operand.hbm [shape: bf16[128,128], index: 4, kind: input, shape index: {}]
  %s5 = inlined_call_operand.vmem [shape: f32[1,128], index: 5, kind: input, shape index: {}]
  %s6 = inlined_call_operand.hbm [shape: f32[16,128], index: 6, kind: output, shape index: {}]
  %s7 = sld [smem:[#allocation0]]
  $region69: #{tpu_custom_call.1} parent=0
    _
  %s9 = ssub.s32 1, %s7
  %s10 = scalar_select 0, %s9, %s7
  $region1: #{tpu_custom_call.1} parent=0
    #allocation2 [shape = 'u8[8192]{0}', space=vmem, size = 0x2000, scoped, tag = 'input window, operand 0']
    #allocation3 [shape = 's32[2]{0}', space=sflag, size = 0x8, scoped, tag = 'scoped memory for tpu_custom_call.1']
    #allocation4 [shape = 's32[2]{0}', space=sflag, size = 0x8, scoped, tag = 'scoped memory for tpu_custom_call.1']
    #allocation5 [shape = 'u8[512]{0}', space=vmem, size = 0x400, scoped, tag = 'input window, operand 1, single buffered']
    #allocation6 [shape = 's32[1]{0}', space=sflag, size = 0x4, scoped, tag = 'scoped memory for tpu_custom_call.1']
    #allocation7 [shape = 'u8[32768]{0}', space=vmem, size = 0x8000, scoped, tag = 'input window, operand 4, single buffered']
    #allocation8 [shape = 'u8[8192]{0}', space=vmem, size = 0x2000, scoped, tag = 'output window, operand 0']
    %11 = vsyncpa [#allocation3], 0
    %s12 = scalar_lea.sflag [#allocation3], 1
    %13 = vsyncpa %s12, 0
    %14 = vsyncpa [#allocation6], 0
    %15 = vsyncpa [#allocation4], 0
    %s16 = scalar_lea.sflag [#allocation4], 1
    %17 = vsyncpa %s16, 0
    loop: start=0, step=1, limit=4
    $region2: #{tpu_custom_call.1} parent=1 // loop_pre_header
      _
    $region3: #{tpu_custom_call.1} parent=1 // loop_header
      %s19 = sphi 0, %s23
      %p20 = scmp.ge.s32.totalorder %s19, 4
      %s29 = sphi 0, %s31
      %s32 = sphi 0, %s29
      %s33 = sphi 0, %s32
      %s49 = sphi 0, %s33
      %s53 = sphi 0, %s53
      %s55 = sphi 0, %s53
      %s56 = sphi 0, %s55
      %s70 = sphi 0, %s56
      %s74 = sphi 0, %s74
      %s76 = sphi 0, %s74
      %s77 = sphi 0, %s76
      %s91 = sphi 0, %s77
      %s95 = sphi 0, %s95
      %s97 = sphi 0, %s95
      %s98 = sphi 0, %s97
      %s112 = sphi 0, %s98
      %s116 = sphi 0, %s116
      %s118 = sphi 0, %s116
      %s119 = sphi 0, %s118
      %s133 = sphi 0, %s119
      %s137 = sphi 0, %s137
      %s139 = sphi 0, %s137
      %s140 = sphi 0, %s139
      %s154 = sphi 0, %s140
      %s160 = sphi 0, %s162
      %s163 = sphi 0, %s160
      %s164 = sphi 0, %s163
      %s180 = sphi 0, %s164
    $region4: #{tpu_custom_call.1} parent=1 // loop_header_branch
      %22 = sbr.rel (%p20) target = $region8
    $region5: #{tpu_custom_call.1} parent=1 // loop_body
      %s24 = ssub.s32 %s19, 1
      %s25 = ssub.s32 %s19, 2
      %s26 = sadd.s32 %s19, 1
      %s27 = ssub.s32 %s19, %s26
      %p28 = scmp.eq.s32.totalorder %s27, 0
      %s30 = sadd.s32 %s29, 1
      %s31 = scalar_select %p28, %s29, %s30
      %p34 = pneg %p28
      %p35 = scmp.eq.s32.totalorder %s19, 1
      %p36 = por %p34, %p35
      %p37 = scmp.ne.s32.totalorder %s29, %s32
      %p38 = scmp.eq.s32.totalorder %s19, 0
      %p39 = por %p37, %p38
      %p40 = scmp.ne.s32.totalorder %s29, %s32
      %p41 = scmp.eq.s32.totalorder %s24, 1
      %p42 = por %p40, %p41
      %p43 = scmp.ne.s32.totalorder %s32, %s33
      %p44 = scmp.eq.s32.totalorder %s24, 0
      %p45 = por %p43, %p44
      %p46 = scmp.ne.s32.totalorder %s32, %s33
      %p47 = scmp.eq.s32.totalorder %s25, 1
      %p48 = por %p46, %p47
      %p50 = scmp.ne.s32.totalorder %s33, %s49
      %p51 = scmp.eq.s32.totalorder %s25, 0
      %p52 = por %p50, %p51
      %s54 = sadd.s32 %s53, 1
      %p57 = scmp.eq.s32.totalorder %s19, 1
      %p58 = scmp.ne.s32.totalorder %s53, %s55
      %p59 = scmp.eq.s32.totalorder %s19, 0
      %p60 = por %p58, %p59
      %p61 = scmp.ne.s32.totalorder %s53, %s55
      %p62 = scmp.eq.s32.totalorder %s24, 1
      %p63 = por %p61, %p62
      %p64 = scmp.ne.s32.totalorder %s55, %s56
      %p65 = scmp.eq.s32.totalorder %s24, 0
      %p66 = por %p64, %p65
      %p67 = scmp.ne.s32.totalorder %s55, %s56
      %p68 = scmp.eq.s32.totalorder %s25, 1
      %p69 = por %p67, %p68
      %p71 = scmp.ne.s32.totalorder %s56, %s70
      %p72 = scmp.eq.s32.totalorder %s25, 0
      %p73 = por %p71, %p72
      %s75 = sadd.s32 %s74, 1
      %p78 = scmp.eq.s32.totalorder %s19, 1
      %p79 = scmp.ne.s32.totalorder %s74, %s76
      %p80 = scmp.eq.s32.totalorder %s19, 0
      %p81 = por %p79, %p80
      %p82 = scmp.ne.s32.totalorder %s74, %s76
      %p83 = scmp.eq.s32.totalorder %s24, 1
      %p84 = por %p82, %p83
      %p85 = scmp.ne.s32.totalorder %s76, %s77
      %p86 = scmp.eq.s32.totalorder %s24, 0
      %p87 = por %p85, %p86
      %p88 = scmp.ne.s32.totalorder %s76, %s77
      %p89 = scmp.eq.s32.totalorder %s25, 1
      %p90 = por %p88, %p89
      %p92 = scmp.ne.s32.totalorder %s77, %s91
      %p93 = scmp.eq.s32.totalorder %s25, 0
      %p94 = por %p92, %p93
      %s96 = sadd.s32 %s95, 1
      %p99 = scmp.eq.s32.totalorder %s19, 1
      %p100 = scmp.ne.s32.totalorder %s95, %s97
      %p101 = scmp.eq.s32.totalorder %s19, 0
      %p102 = por %p100, %p101
      %p103 = scmp.ne.s32.totalorder %s95, %s97
      %p104 = scmp.eq.s32.totalorder %s24, 1
      %p105 = por %p103, %p104
      %p106 = scmp.ne.s32.totalorder %s97, %s98
      %p107 = scmp.eq.s32.totalorder %s24, 0
      %p108 = por %p106, %p107
      %p109 = scmp.ne.s32.totalorder %s97, %s98
      %p110 = scmp.eq.s32.totalorder %s25, 1
      %p111 = por %p109, %p110
      %p113 = scmp.ne.s32.totalorder %s98, %s112
      %p114 = scmp.eq.s32.totalorder %s25, 0
      %p115 = por %p113, %p114
      %s117 = sadd.s32 %s116, 1
      %p120 = scmp.eq.s32.totalorder %s19, 1
      %p121 = scmp.ne.s32.totalorder %s116, %s118
      %p122 = scmp.eq.s32.totalorder %s19, 0
      %p123 = por %p121, %p122
      %p124 = scmp.ne.s32.totalorder %s116, %s118
      %p125 = scmp.eq.s32.totalorder %s24, 1
      %p126 = por %p124, %p125
      %p127 = scmp.ne.s32.totalorder %s118, %s119
      %p128 = scmp.eq.s32.totalorder %s24, 0
      %p129 = por %p127, %p128
      %p130 = scmp.ne.s32.totalorder %s118, %s119
      %p131 = scmp.eq.s32.totalorder %s25, 1
      %p132 = por %p130, %p131
      %p134 = scmp.ne.s32.totalorder %s119, %s133
      %p135 = scmp.eq.s32.totalorder %s25, 0
      %p136 = por %p134, %p135
      %s138 = sadd.s32 %s137, 1
      %p141 = scmp.eq.s32.totalorder %s19, 1
      %p142 = scmp.ne.s32.totalorder %s137, %s139
      %p143 = scmp.eq.s32.totalorder %s19, 0
      %p144 = por %p142, %p143
      %p145 = scmp.ne.s32.totalorder %s137, %s139
      %p146 = scmp.eq.s32.totalorder %s24, 1
      %p147 = por %p145, %p146
      %p148 = scmp.ne.s32.totalorder %s139, %s140
      %p149 = scmp.eq.s32.totalorder %s24, 0
      %p150 = por %p148, %p149
      %p151 = scmp.ne.s32.totalorder %s139, %s140
      %p152 = scmp.eq.s32.totalorder %s25, 1
      %p153 = por %p151, %p152
      %p155 = scmp.ne.s32.totalorder %s140, %s154
      %p156 = scmp.eq.s32.totalorder %s25, 0
      %p157 = por %p155, %p156
      %s158 = ssub.s32 %s19, %s26
      %p159 = scmp.eq.s32.totalorder %s158, 0
      %s161 = sadd.s32 %s160, 1
      %s162 = scalar_select %p159, %s160, %s161
      %p165 = pneg %p159
      %p166 = scmp.eq.s32.totalorder %s19, 1
      %p167 = por %p165, %p166
      %p168 = scmp.ne.s32.totalorder %s160, %s163
      %p169 = scmp.eq.s32.totalorder %s19, 0
      %p170 = por %p168, %p169
      %p171 = scmp.ne.s32.totalorder %s160, %s163
      %p172 = scmp.eq.s32.totalorder %s24, 1
      %p173 = por %p171, %p172
      %p174 = scmp.ne.s32.totalorder %s163, %s164
      %p175 = scmp.eq.s32.totalorder %s24, 0
      %p176 = por %p174, %p175
      %p177 = scmp.ne.s32.totalorder %s163, %s164
      %p178 = scmp.eq.s32.totalorder %s25, 1
      %p179 = por %p177, %p178
      %p181 = scmp.ne.s32.totalorder %s164, %s180
      %p182 = scmp.eq.s32.totalorder %s25, 0
      %p183 = por %p181, %p182
      %p184 = scmp.le.s32.totalorder 1, %s19
      %p185 = scmp.lt.s32.totalorder %s19, 3
      %p186 = pnand %p184, %p185
      %p187 = pneg %p186
      // Predicated region
      $region9: #{tpu_custom_call.1} parent=5 // pred_check
        _
      $region10: #{tpu_custom_call.1} parent=5 // pred_check_branch
        %189 = sbr.rel (%p186) target = $region12
      $region11: #{tpu_custom_call.1} parent=5 // pred_region
        %s190 = ssub.s32 %s19, 1
        // Predicated region
        $region13: #{tpu_custom_call.1} parent=11 // pred_check
          %p191 = pneg %p66
        $region14: #{tpu_custom_call.1} parent=11 // pred_check_branch
          %193 = sbr.rel (%p191) target = $region16
        $region15: #{tpu_custom_call.1} parent=11 // pred_region
          %195 = vsyncadd [#allocation6], 0
          %s197 = sshll.u32 %s1, 4
          %s198 = int_to_ptr.hbm [resolvable:$true] %s197
          %s199 = sshll.u32 [#allocation5], 4
          %s200 = int_to_ptr.vmem [resolvable:$true] %s199
          %202 = dma.hbm_to_vmem [thread:$0]  %s198, 16, %s200, [#allocation6]
        $region16: #{tpu_custom_call.1} parent=11 // pred_fallthru
          _
        // Predicated region
        $region17: #{tpu_custom_call.1} parent=11 // pred_check
          %p203 = pneg %p87
        $region18: #{tpu_custom_call.1} parent=11 // pred_check_branch
          %205 = sbr.rel (%p203) target = $region20
        $region19: #{tpu_custom_call.1} parent=11 // pred_region
          _
        $region20: #{tpu_custom_call.1} parent=11 // pred_fallthru
          _
        // Predicated region
        $region21: #{tpu_custom_call.1} parent=11 // pred_check
          %p206 = pneg %p108
        $region22: #{tpu_custom_call.1} parent=11 // pred_check_branch
          %208 = sbr.rel (%p206) target = $region24
        $region23: #{tpu_custom_call.1} parent=11 // pred_region
          _
        $region24: #{tpu_custom_call.1} parent=11 // pred_fallthru
          _
        // Predicated region
        $region25: #{tpu_custom_call.1} parent=11 // pred_check
          %p209 = pneg %p129
        $region26: #{tpu_custom_call.1} parent=11 // pred_check_branch
          %211 = sbr.rel (%p209) target = $region28
        $region27: #{tpu_custom_call.1} parent=11 // pred_region
          %213 = vsyncadd [#allocation6], 0
          %s214 = sshll.u32 %s4, 4
          %s215 = int_to_ptr.hbm [resolvable:$true] %s214
          %s216 = sshll.u32 [#allocation7], 4
          %s217 = int_to_ptr.vmem [resolvable:$true] %s216
          %222 = dma.hbm_to_vmem [thread:$0]  %s215, 1024, %s217, [#allocation6], 64, 64, 4
        $region28: #{tpu_custom_call.1} parent=11 // pred_fallthru
          _
        // Predicated region
        $region29: #{tpu_custom_call.1} parent=11 // pred_check
          %p223 = pneg %p150
        $region30: #{tpu_custom_call.1} parent=11 // pred_check_branch
          %225 = sbr.rel (%p223) target = $region32
        $region31: #{tpu_custom_call.1} parent=11 // pred_region
          _
        $region32: #{tpu_custom_call.1} parent=11 // pred_fallthru
          _
      $region12: #{tpu_custom_call.1} parent=5 // pred_fallthru
        _
      %p226 = scmp.lt.s32.totalorder %s19, 2
      // Predicated region
      $region33: #{tpu_custom_call.1} parent=5 // pred_check
        %p227 = pneg %p226
      $region34: #{tpu_custom_call.1} parent=5 // pred_check_branch
        %229 = sbr.rel (%p227) target = $region36
      $region35: #{tpu_custom_call.1} parent=5 // pred_region
        // Predicated region
        $region37: #{tpu_custom_call.1} parent=35 // pred_check
          %p230 = pneg %p39
        $region38: #{tpu_custom_call.1} parent=35 // pred_check_branch
          %232 = sbr.rel (%p230) target = $region40
        $region39: #{tpu_custom_call.1} parent=35 // pred_region
          %s233 = sand.u32 %s29, 1
          %s234 = scalar_lea.sflag [#allocation3], %s233
          %s235 = sand.u32 %s29, 1
          %s236 = smul.addr %s235, 8
          %s237 = scalar_lea.vmem [#allocation2], %s236
          %239 = vsyncadd %s234, 0
          %s240 = smul.addr %s19, 8
          %s241 = scalar_lea.hbm %s0, %s240
          %s243 = sshll.u32 %s241, 4
          %s244 = int_to_ptr.hbm [resolvable:$true] %s243
          %s245 = sshll.u32 %s237, 4
          %s246 = int_to_ptr.vmem [resolvable:$true] %s245
          %248 = dma.hbm_to_vmem [thread:$0]  %s244, 128, %s246, %s234
        $region40: #{tpu_custom_call.1} parent=35 // pred_fallthru
          _
      $region36: #{tpu_custom_call.1} parent=5 // pred_fallthru
        _
      %p249 = scmp.le.s32.totalorder 1, %s19
      %p250 = scmp.lt.s32.totalorder %s19, 3
      %p251 = pnand %p249, %p250
      %p252 = pneg %p251
      // Predicated region
      $region41: #{tpu_custom_call.1} parent=5 // pred_check
        _
      $region42: #{tpu_custom_call.1} parent=5 // pred_check_branch
        %254 = sbr.rel (%p251) target = $region44
      $region43: #{tpu_custom_call.1} parent=5 // pred_region
        %s255 = ssub.s32 %s19, 1
        %s256 = sand.u32 %s32, 1
        %s257 = scalar_lea.sflag [#allocation3], %s256
        %s258 = sand.u32 %s32, 1
        %s259 = smul.addr %s258, 8
        %s260 = scalar_lea.vmem [#allocation2], %s259
        // Predicated region
        $region45: #{tpu_custom_call.1} parent=43 // pred_check
          %p261 = pneg %p45
        $region46: #{tpu_custom_call.1} parent=43 // pred_check_branch
          %263 = sbr.rel (%p261) target = $region48
        $region47: #{tpu_custom_call.1} parent=43 // pred_region
          %265 = dma.done %s257, 128
        $region48: #{tpu_custom_call.1} parent=43 // pred_fallthru
          _
        // Predicated region
        $region49: #{tpu_custom_call.1} parent=43 // pred_check
          %p266 = pneg %p66
        $region50: #{tpu_custom_call.1} parent=43 // pred_check_branch
          %268 = sbr.rel (%p266) target = $region52
        $region51: #{tpu_custom_call.1} parent=43 // pred_region
          %270 = dma.done [#allocation6], 16
        $region52: #{tpu_custom_call.1} parent=43 // pred_fallthru
          _
        // Predicated region
        $region53: #{tpu_custom_call.1} parent=43 // pred_check
          %p271 = pneg %p129
        $region54: #{tpu_custom_call.1} parent=43 // pred_check_branch
          %273 = sbr.rel (%p271) target = $region56
        $region55: #{tpu_custom_call.1} parent=43 // pred_region
          %275 = dma.done [#allocation6], 1024
        $region56: #{tpu_custom_call.1} parent=43 // pred_fallthru
          _
        %s276 = sand.u32 %s32, 1
        %s277 = scalar_lea.sflag [#allocation3], %s276
        %s278 = sand.u32 %s32, 1
        %s279 = smul.addr %s278, 8
        %s280 = scalar_lea.vmem [#allocation2], %s279
        %p281 = pneg %p45
        %p282 = pneg %p42
        %p283 = pneg %p66
        %p284 = pneg %p63
        %p285 = pneg %p87
        %p286 = pneg %p84
        %p287 = pneg %p108
        %p288 = pneg %p105
        %p289 = pneg %p129
        %p290 = pneg %p126
        %p291 = pneg %p150
        %p292 = pneg %p147
        %p293 = pneg %p176
        %p294 = pneg %p173
        %s295 = sand.u32 %s163, 1
        %s296 = scalar_lea.sflag [#allocation4], %s295
        %s297 = sand.u32 %s163, 1
        %s298 = smul.addr %s297, 8
        %s299 = scalar_lea.vmem [#allocation8], %s298
        %v300 = vld [vmem:[%s260] sm:$0xff]
        %301 = vadd.xlane.f32.xlu0 %v300
        %v302 = vpop.xlane.xlu0 %301
        %v303 = vmul.f32 %v302, 0.03125
        %v304 = vsub.f32 %v300, %v303
        %v305 = vld [vmem:[#allocation5] sm:$0x1]
        %v307 = vperm.slane %v305, 0
        %v309 = vmul.f32 %v304, %v307
        %v310 = vmul.f32 %v309, %v309
        %311 = vadd.xlane.f32.xlu0 %v310
        %v312 = vpop.xlane.xlu0 %311
        %v313 = vmul.f32 %v312, 0.03125
        %v314 = vadd.f32 %v313, 1e-05
        %v315 = vrsqrt.pop %v314
        %v316 = vmul.f32 %v315, %v314
        %v317 = vmul.f32 %v316, %v315
        %v318 = vmul.f32 0.5, %v317
        %v319 = vsub.f32 1.5, %v318
        %v320 = vmul.f32 %v315, %v319
        %vm321 = vweird.f32 %v314
        %vm322 = vweird.f32 %v315
        %vm323 = vmor %vm321, %vm322
        %v324 = vsel %vm323, %v315, %v320
        %v325 = vmul.f32 %v309, %v324
        %v326 = vld [vmem:[%s2] sm:$0x1]
        %v328 = vperm.slane %v326, 0
        %v330 = vmul.f32 %v325, %v328
        %v331 = vld [vmem:[%s3] sm:$0x1]
        %v333 = vperm.slane %v331, 0
        %v335 = vadd.f32 %v330, %v333
        %v336 = vpack.c.bf16 %v335, %v335
        %v337 = vld [vmem:[#allocation7] sm:$0xf]
        %v338 = vld [vmem:[#allocation7 + $0x4] sm:$0xf]
        %v339 = vld [vmem:[#allocation7 + $0x8] sm:$0xf]
        %v340 = vld [vmem:[#allocation7 + $0xc] sm:$0xf]
        %v341 = vld [vmem:[#allocation7 + $0x10] sm:$0xf]
        %v342 = vld [vmem:[#allocation7 + $0x14] sm:$0xf]
        %v343 = vld [vmem:[#allocation7 + $0x18] sm:$0xf]
        %v344 = vld [vmem:[#allocation7 + $0x1c] sm:$0xf]
        %v345 = vld [vmem:[#allocation7 + $0x20] sm:$0xf]
        %v346 = vld [vmem:[#allocation7 + $0x24] sm:$0xf]
        %v347 = vld [vmem:[#allocation7 + $0x28] sm:$0xf]
        %v348 = vld [vmem:[#allocation7 + $0x2c] sm:$0xf]
        %v349 = vld [vmem:[#allocation7 + $0x30] sm:$0xf]
        %v350 = vld [vmem:[#allocation7 + $0x34] sm:$0xf]
        %v351 = vld [vmem:[#allocation7 + $0x38] sm:$0xf]
        %v352 = vld [vmem:[#allocation7 + $0x3c] sm:$0xf]
        %v353 = vld [vmem:[%s5] sm:$0x1]
        %v355 = vperm.slane %v353, 0
        %v373 = vunpack.c.l.b16 %v337
        %v374 = vunpack.c.l.b16 %v338
        %v375 = vunpack.c.l.b16 %v339
        %v376 = vunpack.c.l.b16 %v340
        %v377 = vunpack.c.l.b16 %v341
        %v378 = vunpack.c.l.b16 %v342
        %v379 = vunpack.c.l.b16 %v343
        %v380 = vunpack.c.l.b16 %v344
        %v381 = vunpack.c.l.b16 %v345
        %v382 = vunpack.c.l.b16 %v346
        %v383 = vunpack.c.l.b16 %v347
        %v384 = vunpack.c.l.b16 %v348
        %v385 = vunpack.c.l.b16 %v349
        %v386 = vunpack.c.l.b16 %v350
        %v387 = vunpack.c.l.b16 %v351
        %v388 = vunpack.c.l.b16 %v352
        %v389 = vpack.c.b16 %v374, %v373
        %v390 = vpack.c.b16 %v376, %v375
        %v391 = vpack.c.b16 %v378, %v377
        %v392 = vpack.c.b16 %v380, %v379
        %v393 = vpack.c.b16 %v382, %v381
        %v394 = vpack.c.b16 %v384, %v383
        %v395 = vpack.c.b16 %v386, %v385
        %v396 = vpack.c.b16 %v388, %v387
        %405 = vmatpush.bf16.msra.mxu0 %v396
        %406 = vmatpush.bf16.msra.mxu0 %v395
        %407 = vmatpush.bf16.msra.mxu0 %v394
        %408 = vmatpush.bf16.msra.mxu0 %v393
        %409 = vmatpush.bf16.msra.mxu0 %v392
        %410 = vmatpush.bf16.msra.mxu0 %v391
        %411 = vmatpush.bf16.msra.mxu0 %v390
        %412 = vmatpush.bf16.msra.mxu0 %v389
        %413 = vmatmul.bf16.gmra.mxu0 %v336
        %v414 = vpop.f32.mrf.mxu0
        %v415 = vadd.f32 %v355, %v414
        %v416 = vpop.f32.mrf.mxu0
        %417 = vdwg.mxu0
        %418 = vst [vmem:[%s299] sm:$0xff] %v415
        %s419 = sand.u32 %s163, 1
        %s420 = scalar_lea.sflag [#allocation4], %s419
        %s421 = sand.u32 %s163, 1
        %s422 = smul.addr %s421, 8
        %s423 = scalar_lea.vmem [#allocation8], %s422
        // Predicated region
        $region57: #{tpu_custom_call.1} parent=43 // pred_check
          %p424 = pneg %p173
        $region58: #{tpu_custom_call.1} parent=43 // pred_check_branch
          %426 = sbr.rel (%p424) target = $region60
        $region59: #{tpu_custom_call.1} parent=43 // pred_region
          %428 = vsyncadd %s420, 0
          %s429 = smul.addr %s24, 8
          %s430 = scalar_lea.hbm %s6, %s429
          %s432 = sshll.u32 %s423, 4
          %s433 = int_to_ptr.vmem [resolvable:$true] %s432
          %s434 = sshll.u32 %s430, 4
          %s435 = int_to_ptr.hbm [resolvable:$true] %s434
          %437 = dma.vmem_to_hbm [thread:$0]  %s433, 128, %s435, %s420
        $region60: #{tpu_custom_call.1} parent=43 // pred_fallthru
          _
      $region44: #{tpu_custom_call.1} parent=5 // pred_fallthru
        _
      %p438 = scmp.le.s32.totalorder 2, %s19
      // Predicated region
      $region61: #{tpu_custom_call.1} parent=5 // pred_check
        %p439 = pneg %p438
      $region62: #{tpu_custom_call.1} parent=5 // pred_check_branch
        %441 = sbr.rel (%p439) target = $region64
      $region63: #{tpu_custom_call.1} parent=5 // pred_region
        %s442 = ssub.s32 %s19, 2
        // Predicated region
        $region65: #{tpu_custom_call.1} parent=63 // pred_check
          %p443 = pneg %p179
        $region66: #{tpu_custom_call.1} parent=63 // pred_check_branch
          %445 = sbr.rel (%p443) target = $region68
        $region67: #{tpu_custom_call.1} parent=63 // pred_region
          %s446 = sand.u32 %s164, 1
          %s447 = scalar_lea.sflag [#allocation4], %s446
          %s448 = sand.u32 %s164, 1
          %s449 = smul.addr %s448, 8
          %s450 = scalar_lea.vmem [#allocation8], %s449
          %452 = dma.done %s447, 128
        $region68: #{tpu_custom_call.1} parent=63 // pred_fallthru
          _
      $region64: #{tpu_custom_call.1} parent=5 // pred_fallthru
        _
    $region6: #{tpu_custom_call.1} parent=1 // loop_footer
      %s23 = sadd.s32 1, %s19
    $region7: #{tpu_custom_call.1} parent=1 // loop_footer_branch
      %18 = sbr.rel target = $region3
    $region8: #{tpu_custom_call.1} parent=1 // loop_exit
      _
    %453 = vsyncpa [#allocation3], 1
    %s454 = scalar_lea.sflag [#allocation3], 1
    %455 = vsyncpa %s454, 1
    %456 = vsyncpa [#allocation6], 1
    %457 = vsyncpa [#allocation4], 1
    %s458 = scalar_lea.sflag [#allocation4], 1
    %459 = vsyncpa %s458, 1

// kernel: tpu_custom_call.1
$region0: #{tpu_custom_call.1}
  #allocation0 [shape = 'u32[]', space=smem, size = 0x4, offset = 0x4, fixed_abs, tag = 'smem constant byte address 0x4 - core index']
  #allocation1 [shape = 'u32[72,128]{1,0:T(1,128)}', space=vmem, size = 0x9000, scoped, tag = 'internal scratch']
  %s0 = inlined_call_operand.hbm [shape: f32[16,128], index: 0, kind: input, shape index: {}]
  %s1 = inlined_call_operand.hbm [shape: f32[1,128], index: 1, kind: input, shape index: {}]
  %s2 = inlined_call_operand.vmem [shape: f32[1,128], index: 2, kind: input, shape index: {}]
  %s3 = inlined_call_operand.vmem [shape: f32[1,128], index: 3, kind: input, shape index: {}]
  %s4 = inlined_call_operand.hbm [shape: bf16[128,128], index: 4, kind: input, shape index: {}]
  %s5 = inlined_call_operand.vmem [shape: f32[1,128], index: 5, kind: input, shape index: {}]
  %s6 = inlined_call_operand.hbm [shape: f32[16,128], index: 6, kind: output, shape index: {}]
  %s7 = sld [smem:[#allocation0]]
  $region69: #{tpu_custom_call.1} parent=0
    _
  %s9 = ssub.s32 1, %s7
  %s10 = scalar_select 0, %s9, %s7
  $region1: #{tpu_custom_call.1} parent=0
    #allocation2 [shape = 'u8[8192]{0}', space=vmem, size = 0x2000, scoped, tag = 'input window, operand 0']
    #allocation3 [shape = 's32[2]{0}', space=sflag, size = 0x8, scoped, tag = 'scoped memory for tpu_custom_call.1']
    #allocation4 [shape = 's32[2]{0}', space=sflag, size = 0x8, scoped, tag = 'scoped memory for tpu_custom_call.1']
    #allocation5 [shape = 'u8[512]{0}', space=vmem, size = 0x400, scoped, tag = 'input window, operand 1, single buffered']
    #allocation6 [shape = 's32[1]{0}', space=sflag, size = 0x4, scoped, tag = 'scoped memory for tpu_custom_call.1']
    #allocation7 [shape = 'u8[32768]{0}', space=vmem, size = 0x8000, scoped, tag = 'input window, operand 4, single buffered']
    #allocation8 [shape = 'u8[8192]{0}', space=vmem, size = 0x2000, scoped, tag = 'output window, operand 0']
    %11 = vsyncpa [#allocation3], 0
    %s12 = scalar_lea.sflag [#allocation3], 1
    %13 = vsyncpa %s12, 0
    %14 = vsyncpa [#allocation6], 0
    %15 = vsyncpa [#allocation4], 0
    %s16 = scalar_lea.sflag [#allocation4], 1
    %17 = vsyncpa %s16, 0
    loop: start=0, step=1, limit=4
    $region2: #{tpu_custom_call.1} parent=1 // loop_pre_header
      _
    $region3: #{tpu_custom_call.1} parent=1 // loop_header
      %s19 = sphi 0, %s23
      %p20 = scmp.ge.s32.totalorder %s19, 4
      %s29 = sphi 0, %s31
      %s32 = sphi 0, %s29
      %s33 = sphi 0, %s32
      %s49 = sphi 0, %s33
      %s53 = sphi 0, %s53
      %s55 = sphi 0, %s53
      %s56 = sphi 0, %s55
      %s70 = sphi 0, %s56
      %s74 = sphi 0, %s74
      %s76 = sphi 0, %s74
      %s77 = sphi 0, %s76
      %s91 = sphi 0, %s77
      %s95 = sphi 0, %s95
      %s97 = sphi 0, %s95
      %s98 = sphi 0, %s97
      %s112 = sphi 0, %s98
      %s116 = sphi 0, %s116
      %s118 = sphi 0, %s116
      %s119 = sphi 0, %s118
      %s133 = sphi 0, %s119
      %s137 = sphi 0, %s137
      %s139 = sphi 0, %s137
      %s140 = sphi 0, %s139
      %s154 = sphi 0, %s140
      %s160 = sphi 0, %s162
      %s163 = sphi 0, %s160
      %s164 = sphi 0, %s163
      %s180 = sphi 0, %s164
    $region4: #{tpu_custom_call.1} parent=1 // loop_header_branch
      %22 = sbr.rel (%p20) target = $region8
    $region5: #{tpu_custom_call.1} parent=1 // loop_body
      %s24 = ssub.s32 %s19, 1
      %s25 = ssub.s32 %s19, 2
      %s26 = sadd.s32 %s19, 1
      %s27 = ssub.s32 %s19, %s26
      %p28 = scmp.eq.s32.totalorder %s27, 0
      %s30 = sadd.s32 %s29, 1
      %s31 = scalar_select %p28, %s29, %s30
      %p34 = pneg %p28
      %p35 = scmp.eq.s32.totalorder %s19, 1
      %p36 = por %p34, %p35
      %p37 = scmp.ne.s32.totalorder %s29, %s32
      %p38 = scmp.eq.s32.totalorder %s19, 0
      %p39 = por %p37, %p38
      %p40 = scmp.ne.s32.totalorder %s29, %s32
      %p41 = scmp.eq.s32.totalorder %s24, 1
      %p42 = por %p40, %p41
      %p43 = scmp.ne.s32.totalorder %s32, %s33
      %p44 = scmp.eq.s32.totalorder %s24, 0
      %p45 = por %p43, %p44
      %p46 = scmp.ne.s32.totalorder %s32, %s33
      %p47 = scmp.eq.s32.totalorder %s25, 1
      %p48 = por %p46, %p47
      %p50 = scmp.ne.s32.totalorder %s33, %s49
      %p51 = scmp.eq.s32.totalorder %s25, 0
      %p52 = por %p50, %p51
      %s54 = sadd.s32 %s53, 1
      %p57 = scmp.eq.s32.totalorder %s19, 1
      %p58 = scmp.ne.s32.totalorder %s53, %s55
      %p59 = scmp.eq.s32.totalorder %s19, 0
      %p60 = por %p58, %p59
      %p61 = scmp.ne.s32.totalorder %s53, %s55
      %p62 = scmp.eq.s32.totalorder %s24, 1
      %p63 = por %p61, %p62
      %p64 = scmp.ne.s32.totalorder %s55, %s56
      %p65 = scmp.eq.s32.totalorder %s24, 0
      %p66 = por %p64, %p65
      %p67 = scmp.ne.s32.totalorder %s55, %s56
      %p68 = scmp.eq.s32.totalorder %s25, 1
      %p69 = por %p67, %p68
      %p71 = scmp.ne.s32.totalorder %s56, %s70
      %p72 = scmp.eq.s32.totalorder %s25, 0
      %p73 = por %p71, %p72
      %s75 = sadd.s32 %s74, 1
      %p78 = scmp.eq.s32.totalorder %s19, 1
      %p79 = scmp.ne.s32.totalorder %s74, %s76
      %p80 = scmp.eq.s32.totalorder %s19, 0
      %p81 = por %p79, %p80
      %p82 = scmp.ne.s32.totalorder %s74, %s76
      %p83 = scmp.eq.s32.totalorder %s24, 1
      %p84 = por %p82, %p83
      %p85 = scmp.ne.s32.totalorder %s76, %s77
      %p86 = scmp.eq.s32.totalorder %s24, 0
      %p87 = por %p85, %p86
      %p88 = scmp.ne.s32.totalorder %s76, %s77
      %p89 = scmp.eq.s32.totalorder %s25, 1
      %p90 = por %p88, %p89
      %p92 = scmp.ne.s32.totalorder %s77, %s91
      %p93 = scmp.eq.s32.totalorder %s25, 0
      %p94 = por %p92, %p93
      %s96 = sadd.s32 %s95, 1
      %p99 = scmp.eq.s32.totalorder %s19, 1
      %p100 = scmp.ne.s32.totalorder %s95, %s97
      %p101 = scmp.eq.s32.totalorder %s19, 0
      %p102 = por %p100, %p101
      %p103 = scmp.ne.s32.totalorder %s95, %s97
      %p104 = scmp.eq.s32.totalorder %s24, 1
      %p105 = por %p103, %p104
      %p106 = scmp.ne.s32.totalorder %s97, %s98
      %p107 = scmp.eq.s32.totalorder %s24, 0
      %p108 = por %p106, %p107
      %p109 = scmp.ne.s32.totalorder %s97, %s98
      %p110 = scmp.eq.s32.totalorder %s25, 1
      %p111 = por %p109, %p110
      %p113 = scmp.ne.s32.totalorder %s98, %s112
      %p114 = scmp.eq.s32.totalorder %s25, 0
      %p115 = por %p113, %p114
      %s117 = sadd.s32 %s116, 1
      %p120 = scmp.eq.s32.totalorder %s19, 1
      %p121 = scmp.ne.s32.totalorder %s116, %s118
      %p122 = scmp.eq.s32.totalorder %s19, 0
      %p123 = por %p121, %p122
      %p124 = scmp.ne.s32.totalorder %s116, %s118
      %p125 = scmp.eq.s32.totalorder %s24, 1
      %p126 = por %p124, %p125
      %p127 = scmp.ne.s32.totalorder %s118, %s119
      %p128 = scmp.eq.s32.totalorder %s24, 0
      %p129 = por %p127, %p128
      %p130 = scmp.ne.s32.totalorder %s118, %s119
      %p131 = scmp.eq.s32.totalorder %s25, 1
      %p132 = por %p130, %p131
      %p134 = scmp.ne.s32.totalorder %s119, %s133
      %p135 = scmp.eq.s32.totalorder %s25, 0
      %p136 = por %p134, %p135
      %s138 = sadd.s32 %s137, 1
      %p141 = scmp.eq.s32.totalorder %s19, 1
      %p142 = scmp.ne.s32.totalorder %s137, %s139
      %p143 = scmp.eq.s32.totalorder %s19, 0
      %p144 = por %p142, %p143
      %p145 = scmp.ne.s32.totalorder %s137, %s139
      %p146 = scmp.eq.s32.totalorder %s24, 1
      %p147 = por %p145, %p146
      %p148 = scmp.ne.s32.totalorder %s139, %s140
      %p149 = scmp.eq.s32.totalorder %s24, 0
      %p150 = por %p148, %p149
      %p151 = scmp.ne.s32.totalorder %s139, %s140
      %p152 = scmp.eq.s32.totalorder %s25, 1
      %p153 = por %p151, %p152
      %p155 = scmp.ne.s32.totalorder %s140, %s154
      %p156 = scmp.eq.s32.totalorder %s25, 0
      %p157 = por %p155, %p156
      %s158 = ssub.s32 %s19, %s26
      %p159 = scmp.eq.s32.totalorder %s158, 0
      %s161 = sadd.s32 %s160, 1
      %s162 = scalar_select %p159, %s160, %s161
      %p165 = pneg %p159
      %p166 = scmp.eq.s32.totalorder %s19, 1
      %p167 = por %p165, %p166
      %p168 = scmp.ne.s32.totalorder %s160, %s163
      %p169 = scmp.eq.s32.totalorder %s19, 0
      %p170 = por %p168, %p169
      %p171 = scmp.ne.s32.totalorder %s160, %s163
      %p172 = scmp.eq.s32.totalorder %s24, 1
      %p173 = por %p171, %p172
      %p174 = scmp.ne.s32.totalorder %s163, %s164
      %p175 = scmp.eq.s32.totalorder %s24, 0
      %p176 = por %p174, %p175
      %p177 = scmp.ne.s32.totalorder %s163, %s164
      %p178 = scmp.eq.s32.totalorder %s25, 1
      %p179 = por %p177, %p178
      %p181 = scmp.ne.s32.totalorder %s164, %s180
      %p182 = scmp.eq.s32.totalorder %s25, 0
      %p183 = por %p181, %p182
      %p184 = scmp.le.s32.totalorder 1, %s19
      %p185 = scmp.lt.s32.totalorder %s19, 3
      %p186 = pnand %p184, %p185
      %p187 = pneg %p186
      // Predicated region
      $region9: #{tpu_custom_call.1} parent=5 // pred_check
        _
      $region10: #{tpu_custom_call.1} parent=5 // pred_check_branch
        %189 = sbr.rel (%p186) target = $region12
      $region11: #{tpu_custom_call.1} parent=5 // pred_region
        %s190 = ssub.s32 %s19, 1
        // Predicated region
        $region13: #{tpu_custom_call.1} parent=11 // pred_check
          %p191 = pneg %p66
        $region14: #{tpu_custom_call.1} parent=11 // pred_check_branch
          %193 = sbr.rel (%p191) target = $region16
        $region15: #{tpu_custom_call.1} parent=11 // pred_region
          %195 = vsyncadd [#allocation6], 0
          %s197 = sshll.u32 %s1, 4
          %s198 = int_to_ptr.hbm [resolvable:$true] %s197
          %s199 = sshll.u32 [#allocation5], 4
          %s200 = int_to_ptr.vmem [resolvable:$true] %s199
          %202 = dma.hbm_to_vmem [thread:$0]  %s198, 16, %s200, [#allocation6]
        $region16: #{tpu_custom_call.1} parent=11 // pred_fallthru
          _
        // Predicated region
        $region17: #{tpu_custom_call.1} parent=11 // pred_check
          %p203 = pneg %p87
        $region18: #{tpu_custom_call.1} parent=11 // pred_check_branch
          %205 = sbr.rel (%p203) target = $region20
        $region19: #{tpu_custom_call.1} parent=11 // pred_region
          _
        $region20: #{tpu_custom_call.1} parent=11 // pred_fallthru
          _
        // Predicated region
        $region21: #{tpu_custom_call.1} parent=11 // pred_check
          %p206 = pneg %p108
        $region22: #{tpu_custom_call.1} parent=11 // pred_check_branch
          %208 = sbr.rel (%p206) target = $region24
        $region23: #{tpu_custom_call.1} parent=11 // pred_region
          _
        $region24: #{tpu_custom_call.1} parent=11 // pred_fallthru
          _
        // Predicated region
        $region25: #{tpu_custom_call.1} parent=11 // pred_check
          %p209 = pneg %p129
        $region26: #{tpu_custom_call.1} parent=11 // pred_check_branch
          %211 = sbr.rel (%p209) target = $region28
        $region27: #{tpu_custom_call.1} parent=11 // pred_region
          %213 = vsyncadd [#allocation6], 0
          %s214 = sshll.u32 %s4, 4
          %s215 = int_to_ptr.hbm [resolvable:$true] %s214
          %s216 = sshll.u32 [#allocation7], 4
          %s217 = int_to_ptr.vmem [resolvable:$true] %s216
          %222 = dma.hbm_to_vmem [thread:$0]  %s215, 1024, %s217, [#allocation6], 64, 64, 4
        $region28: #{tpu_custom_call.1} parent=11 // pred_fallthru
          _
        // Predicated region
        $region29: #{tpu_custom_call.1} parent=11 // pred_check
          %p223 = pneg %p150
        $region30: #{tpu_custom_call.1} parent=11 // pred_check_branch
          %225 = sbr.rel (%p223) target = $region32
        $region31: #{tpu_custom_call.1} parent=11 // pred_region
          _
        $region32: #{tpu_custom_call.1} parent=11 // pred_fallthru
          _
      $region12: #{tpu_custom_call.1} parent=5 // pred_fallthru
        _
      %p226 = scmp.lt.s32.totalorder %s19, 2
      // Predicated region
      $region33: #{tpu_custom_call.1} parent=5 // pred_check
        %p227 = pneg %p226
      $region34: #{tpu_custom_call.1} parent=5 // pred_check_branch
        %229 = sbr.rel (%p227) target = $region36
      $region35: #{tpu_custom_call.1} parent=5 // pred_region
        // Predicated region
        $region37: #{tpu_custom_call.1} parent=35 // pred_check
          %p230 = pneg %p39
        $region38: #{tpu_custom_call.1} parent=35 // pred_check_branch
          %232 = sbr.rel (%p230) target = $region40
        $region39: #{tpu_custom_call.1} parent=35 // pred_region
          %s233 = sand.u32 %s29, 1
          %s234 = scalar_lea.sflag [#allocation3], %s233
          %s235 = sand.u32 %s29, 1
          %s236 = smul.addr %s235, 8
          %s237 = scalar_lea.vmem [#allocation2], %s236
          %239 = vsyncadd %s234, 0
          %s240 = smul.addr %s19, 8
          %s241 = scalar_lea.hbm %s0, %s240
          %s243 = sshll.u32 %s241, 4
          %s244 = int_to_ptr.hbm [resolvable:$true] %s243
          %s245 = sshll.u32 %s237, 4
          %s246 = int_to_ptr.vmem [resolvable:$true] %s245
          %248 = dma.hbm_to_vmem [thread:$0]  %s244, 128, %s246, %s234
        $region40: #{tpu_custom_call.1} parent=35 // pred_fallthru
          _
      $region36: #{tpu_custom_call.1} parent=5 // pred_fallthru
        _
      %p249 = scmp.le.s32.totalorder 1, %s19
      %p250 = scmp.lt.s32.totalorder %s19, 3
      %p251 = pnand %p249, %p250
      %p252 = pneg %p251
      // Predicated region
      $region41: #{tpu_custom_call.1} parent=5 // pred_check
        _
      $region42: #{tpu_custom_call.1} parent=5 // pred_check_branch
        %254 = sbr.rel (%p251) target = $region44
      $region43: #{tpu_custom_call.1} parent=5 // pred_region
        %s255 = ssub.s32 %s19, 1
        %s256 = sand.u32 %s32, 1
        %s257 = scalar_lea.sflag [#allocation3], %s256
        %s258 = sand.u32 %s32, 1
        %s259 = smul.addr %s258, 8
        %s260 = scalar_lea.vmem [#allocation2], %s259
        // Predicated region
        $region45: #{tpu_custom_call.1} parent=43 // pred_check
          %p261 = pneg %p45
        $region46: #{tpu_custom_call.1} parent=43 // pred_check_branch
          %263 = sbr.rel (%p261) target = $region48
        $region47: #{tpu_custom_call.1} parent=43 // pred_region
          %265 = dma.done %s257, 128
        $region48: #{tpu_custom_call.1} parent=43 // pred_fallthru
          _
        // Predicated region
        $region49: #{tpu_custom_call.1} parent=43 // pred_check
          %p266 = pneg %p66
        $region50: #{tpu_custom_call.1} parent=43 // pred_check_branch
          %268 = sbr.rel (%p266) target = $region52
        $region51: #{tpu_custom_call.1} parent=43 // pred_region
          %270 = dma.done [#allocation6], 16
        $region52: #{tpu_custom_call.1} parent=43 // pred_fallthru
          _
        // Predicated region
        $region53: #{tpu_custom_call.1} parent=43 // pred_check
          %p271 = pneg %p129
        $region54: #{tpu_custom_call.1} parent=43 // pred_check_branch
          %273 = sbr.rel (%p271) target = $region56
        $region55: #{tpu_custom_call.1} parent=43 // pred_region
          %275 = dma.done [#allocation6], 1024
        $region56: #{tpu_custom_call.1} parent=43 // pred_fallthru
          _
        %s276 = sand.u32 %s32, 1
        %s277 = scalar_lea.sflag [#allocation3], %s276
        %s278 = sand.u32 %s32, 1
        %s279 = smul.addr %s278, 8
        %s280 = scalar_lea.vmem [#allocation2], %s279
        %p281 = pneg %p45
        %p282 = pneg %p42
        %p283 = pneg %p66
        %p284 = pneg %p63
        %p285 = pneg %p87
        %p286 = pneg %p84
        %p287 = pneg %p108
        %p288 = pneg %p105
        %p289 = pneg %p129
        %p290 = pneg %p126
        %p291 = pneg %p150
        %p292 = pneg %p147
        %p293 = pneg %p176
        %p294 = pneg %p173
        %s295 = sand.u32 %s163, 1
        %s296 = scalar_lea.sflag [#allocation4], %s295
        %s297 = sand.u32 %s163, 1
        %s298 = smul.addr %s297, 8
        %s299 = scalar_lea.vmem [#allocation8], %s298
        %v300 = vld [vmem:[%s260] sm:$0xff]
        %301 = vadd.xlane.f32.xlu0 %v300
        %v302 = vpop.xlane.xlu0 %301
        %v303 = vmul.f32 %v302, 0.03125
        %v304 = vsub.f32 %v300, %v303
        %v305 = vld [vmem:[#allocation5] sm:$0x1]
        %v307 = vperm.slane %v305, 0
        %v309 = vmul.f32 %v304, %v307
        %v310 = vmul.f32 %v309, %v309
        %311 = vadd.xlane.f32.xlu0 %v310
        %v312 = vpop.xlane.xlu0 %311
        %v313 = vmul.f32 %v312, 0.03125
        %v314 = vadd.f32 %v313, 1e-05
        %v315 = vrsqrt.pop %v314
        %v316 = vmul.f32 %v315, %v314
        %v317 = vmul.f32 %v316, %v315
        %v318 = vmul.f32 0.5, %v317
        %v319 = vsub.f32 1.5, %v318
        %v320 = vmul.f32 %v315, %v319
        %vm321 = vweird.f32 %v314
        %vm322 = vweird.f32 %v315
        %vm323 = vmor %vm321, %vm322
        %v324 = vsel %vm323, %v315, %v320
        %v325 = vmul.f32 %v309, %v324
        %v326 = vld [vmem:[%s2] sm:$0x1]
        %v328 = vperm.slane %v326, 0
        %v330 = vmul.f32 %v325, %v328
        %v331 = vld [vmem:[%s3] sm:$0x1]
        %v333 = vperm.slane %v331, 0
        %v335 = vadd.f32 %v330, %v333
        %v336 = vpack.c.bf16 %v335, %v335
        %v337 = vld [vmem:[#allocation7] sm:$0xf]
        %v338 = vld [vmem:[#allocation7 + $0x4] sm:$0xf]
        %v339 = vld [vmem:[#allocation7 + $0x8] sm:$0xf]
        %v340 = vld [vmem:[#allocation7 + $0xc] sm:$0xf]
        %v341 = vld [vmem:[#allocation7 + $0x10] sm:$0xf]
        %v342 = vld [vmem:[#allocation7 + $0x14] sm:$0xf]
        %v343 = vld [vmem:[#allocation7 + $0x18] sm:$0xf]
        %v344 = vld [vmem:[#allocation7 + $0x1c] sm:$0xf]
        %v345 = vld [vmem:[#allocation7 + $0x20] sm:$0xf]
        %v346 = vld [vmem:[#allocation7 + $0x24] sm:$0xf]
        %v347 = vld [vmem:[#allocation7 + $0x28] sm:$0xf]
        %v348 = vld [vmem:[#allocation7 + $0x2c] sm:$0xf]
        %v349 = vld [vmem:[#allocation7 + $0x30] sm:$0xf]
        %v350 = vld [vmem:[#allocation7 + $0x34] sm:$0xf]
        %v351 = vld [vmem:[#allocation7 + $0x38] sm:$0xf]
        %v352 = vld [vmem:[#allocation7 + $0x3c] sm:$0xf]
        %v353 = vld [vmem:[%s5] sm:$0x1]
        %v355 = vperm.slane %v353, 0
        %v373 = vunpack.c.l.b16 %v337
        %v374 = vunpack.c.l.b16 %v338
        %v375 = vunpack.c.l.b16 %v339
        %v376 = vunpack.c.l.b16 %v340
        %v377 = vunpack.c.l.b16 %v341
        %v378 = vunpack.c.l.b16 %v342
        %v379 = vunpack.c.l.b16 %v343
        %v380 = vunpack.c.l.b16 %v344
        %v381 = vunpack.c.l.b16 %v345
        %v382 = vunpack.c.l.b16 %v346
        %v383 = vunpack.c.l.b16 %v347
        %v384 = vunpack.c.l.b16 %v348
        %v385 = vunpack.c.l.b16 %v349
        %v386 = vunpack.c.l.b16 %v350
        %v387 = vunpack.c.l.b16 %v351
        %v388 = vunpack.c.l.b16 %v352
        %v389 = vpack.c.b16 %v374, %v373
        %v390 = vpack.c.b16 %v376, %v375
        %v391 = vpack.c.b16 %v378, %v377
        %v392 = vpack.c.b16 %v380, %v379
        %v393 = vpack.c.b16 %v382, %v381
        %v394 = vpack.c.b16 %v384, %v383
        %v395 = vpack.c.b16 %v386, %v385
        %v396 = vpack.c.b16 %v388, %v387
        %405 = vmatpush.bf16.msra.mxu0 %v396
        %406 = vmatpush.bf16.msra.mxu0 %v395
        %407 = vmatpush.bf16.msra.mxu0 %v394
        %408 = vmatpush.bf16.msra.mxu0 %v393
        %409 = vmatpush.bf16.msra.mxu0 %v392
        %410 = vmatpush.bf16.msra.mxu0 %v391
        %411 = vmatpush.bf16.msra.mxu0 %v390
        %412 = vmatpush.bf16.msra.mxu0 %v389
        %413 = vmatmul.bf16.gmra.mxu0 %v336
        %v414 = vpop.f32.mrf.mxu0
        %v415 = vadd.f32 %v355, %v414
        %v416 = vpop.f32.mrf.mxu0
        %417 = vdwg.mxu0
        %418 = vst [vmem:[%s299] sm:$0xff] %v415
        %s419 = sand.u32 %s163, 1
        %s420 = scalar_lea.sflag [#allocation4], %s419
        %s421 = sand.u32 %s163, 1
        %s422 = smul.addr %s421, 8
        %s423 = scalar_lea.vmem [#allocation8], %s422
        // Predicated region
        $region57: #{tpu_custom_call.1} parent=43 // pred_check
          %p424 = pneg %p173
        $region58: #{tpu_custom_call.1} parent=43 // pred_check_branch
          %426 = sbr.rel (%p424) target = $region60
        $region59: #{tpu_custom_call.1} parent=43 // pred_region
          %428 = vsyncadd %s420, 0
          %s429 = smul.addr %s24, 8
          %s430 = scalar_lea.hbm %s6, %s429
          %s432 = sshll.u32 %s423, 4
          %s433 = int_to_ptr.vmem [resolvable:$true] %s432
          %s434 = sshll.u32 %s430, 4
          %s435 = int_to_ptr.hbm [resolvable:$true] %s434
          %437 = dma.vmem_to_hbm [thread:$0]  %s433, 128, %s435, %s420
        $region60: #{tpu_custom_call.1} parent=43 // pred_fallthru
          _
      $region44: #{tpu_custom_call.1} parent=5 // pred_fallthru
        _
      %p438 = scmp.le.s32.totalorder 2, %s19
      // Predicated region
      $region61: #{tpu_custom_call.1} parent=5 // pred_check
        %p439 = pneg %p438
      $region62: #{tpu_custom_call.1} parent=5 // pred_check_branch
        %441 = sbr.rel (%p439) target = $region64
      $region63: #{tpu_custom_call.1} parent=5 // pred_region
        %s442 = ssub.s32 %s19, 2
        // Predicated region
        $region65: #{tpu_custom_call.1} parent=63 // pred_check
          %p443 = pneg %p179
        $region66: #{tpu_custom_call.1} parent=63 // pred_check_branch
          %445 = sbr.rel (%p443) target = $region68
        $region67: #{tpu_custom_call.1} parent=63 // pred_region
          %s446 = sand.u32 %s164, 1
          %s447 = scalar_lea.sflag [#allocation4], %s446
          %s448 = sand.u32 %s164, 1
          %s449 = smul.addr %s448, 8
          %s450 = scalar_lea.vmem [#allocation8], %s449
          %452 = dma.done %s447, 128
        $region68: #{tpu_custom_call.1} parent=63 // pred_fallthru
          _
      $region64: #{tpu_custom_call.1} parent=5 // pred_fallthru
        _
    $region6: #{tpu_custom_call.1} parent=1 // loop_footer
      %s23 = sadd.s32 1, %s19
    $region7: #{tpu_custom_call.1} parent=1 // loop_footer_branch
      %18 = sbr.rel target = $region3
    $region8: #{tpu_custom_call.1} parent=1 // loop_exit
      _
    %453 = vsyncpa [#allocation3], 1
    %s454 = scalar_lea.sflag [#allocation3], 1
    %455 = vsyncpa %s454, 1
    %456 = vsyncpa [#allocation6], 1
    %457 = vsyncpa [#allocation4], 1
    %s458 = scalar_lea.sflag [#allocation4], 1
    %459 = vsyncpa %s458, 1

</llo_original>
